<compile_context>
chip_gen: v7x
topology: tpu7x:2x2x1
jax: 0.10.0
libtpu: 0.0.40
codegen_flags: <defaults>
</compile_context>

<pallas_src>
import numpy as np
import jax
import jax.numpy as jnp
from jax.experimental import pallas as pl
from jax.experimental.pallas import tpu as pltpu

SIG_LEN = 178            # signal length == image width (hardcoded 178 in the module)
IMG = 178                # image height/width
NUM_CLASSES = 5
BLOCK_B = 32             # batch elements per grid step (amortizes ~0.35us/step overhead)


# ---------------------------------- Pallas kernel ----------------------------------
def _make_kernel(smin: float, denom: float):
    # smin / denom are plain Python floats -> inlined as weak f32 literals in the jaxpr,
    # NOT captured device constants.
    def kernel(x_ref, img_ref):
        sig = x_ref[...]                                             # (BB, 1, 178) f32
        # Match torch op order exactly: floor(178 * (x - min) / (max - min)), all f32.
        xi = jnp.floor((sig - smin) * 178.0 / denom).astype(jnp.int32)
        rowv = 177 - xi                                              # target row per column
        # torch advanced indexing wraps negative indices (x == signals_all_max -> row -1 -> 177);
        # rows > 177 (x < signals_all_min) are silently dropped (no pixel).
        rowv = jnp.where(rowv < 0, rowv + IMG, rowv)                 # (BB, 1, 178)
        # Single (IMG, IMG) row-index iota; broadcasting against rowv gives (BB, IMG, IMG).
        r_iota = jax.lax.broadcasted_iota(jnp.int32, (IMG, IMG), 0)
        img_ref[...] = jnp.where(r_iota == rowv, 255.0, 0.0).astype(img_ref.dtype)

    return kernel


# ---------------------------------- wrappers ----------------------------------
def signal_as_image_1ch(x, smin, smax, block_b=BLOCK_B):
    """x: (B, 1, 178) -> (B, 178, 178) bfloat16 rasterized trace (single channel)."""
    B = x.shape[0]
    # keep grid >= 2 whenever B >= 2 so both v7x TensorCores get work (free on v5e/v6e)
    BB = max(1, min(int(block_b), pl.cdiv(B, 2)))
    grid_b = pl.cdiv(B, BB)
    Bp = grid_b * BB
    xf = x.astype(jnp.float32)
    if Bp != B:
        xf = jnp.pad(xf, ((0, Bp - B), (0, 0), (0, 0)))
    denom = float(smax) - float(smin)

    call = pl.pallas_call(
        _make_kernel(float(smin), denom),
        out_shape=jax.ShapeDtypeStruct((Bp, IMG, IMG), jnp.bfloat16),
        grid=(grid_b,),
        in_specs=[pl.BlockSpec((BB, 1, SIG_LEN), lambda b: (b, 0, 0))],
        out_specs=pl.BlockSpec((BB, IMG, IMG), lambda b: (b, 0, 0)),
        compiler_params=pltpu.CompilerParams(dimension_semantics=("parallel",)),
    )
    img = call(xf)
    return img[:B] if Bp != B else img


def signal_as_image(x, smin, smax):
    """Full 3-channel image, exactly torch.cat((out, out, out), 1): (B, 3, 178, 178).
    NOTE: a real conv trunk should fold the 3x replication into its first conv's
    input-channel weights rather than materializing this tensor."""
    img1 = signal_as_image_1ch(x, smin, smax)
    B = x.shape[0]
    return jnp.broadcast_to(img1[:, None, :, :], (B, 3, IMG, IMG))


def forward(x, smin, smax, head_w, head_b):
    # TODO(synk): `base_model` (an external torchvision CNN trunk passed to __init__) has no
    # in-module definition; stand-in trunk = global-average-pool over the rasterized image
    # (the 3 replicated channels pool identically, so only the 1-channel image is consumed)
    # + the replace_last_layer Linear(num_classes) head, computed in plain jnp.
    img1 = signal_as_image_1ch(x, smin, smax)                        # (B, 178, 178) bf16
    feats = jnp.mean(img1.astype(jnp.float32), axis=(1, 2))          # (B,), == 255/178 when in range
    f3 = jnp.broadcast_to(feats[:, None], (x.shape[0], 3))           # 3 identical channels
    return f3 @ head_w + head_b                                      # (B, NUM_CLASSES)


# ---------------------------------- main ----------------------------------
if __name__ == "__main__":
    key = jax.random.PRNGKey(0)
    klev, kw, kb = jax.random.split(key, 3)

    B = 8
    smin, smax = -1.0, 1.0
    # Deterministic mid-bin signals: quantization lands exactly on `levels`
    # (far from floor boundaries -> robust against 1-ulp divide differences).
    levels = jax.random.randint(klev, (B, 1, SIG_LEN), 0, 178)
    x = smin + (levels.astype(jnp.float32) + 0.5) * ((smax - smin) / 178.0)
    # exercise the exact-max (negative-index wrap) and exact-min paths deterministically
    x = x.at[0, 0, 0].set(smax)
    x = x.at[0, 0, 1].set(smin)

    # deterministic "replaced last layer" parameters (Linear: 3 stand-in feats -> num_classes)
    bound = 1.0 / np.sqrt(3.0)
    head_w = jax.random.uniform(kw, (3, NUM_CLASSES), jnp.float32, -bound, bound)
    head_b = jax.random.uniform(kb, (NUM_CLASSES,), jnp.float32, -bound, bound)

    img1 = jax.block_until_ready(signal_as_image_1ch(x, smin, smax))
    img3 = jax.block_until_ready(signal_as_image(x, smin, smax))
    logits = jax.block_until_ready(forward(x, smin, smax, head_w, head_b))

    # ---- numpy reference of the rasterization (torch semantics) ----
    lv = np.asarray(levels)[:, 0, :]
    rows = 177 - lv                      # all in [0, 177] for mid-bin samples
    rows[0, 0] = 177                     # x == smax -> xi = 178 -> row -1 -> wraps to 177
    rows[0, 1] = 177                     # x == smin -> xi = 0   -> row 177
    ref = np.zeros((B, IMG, IMG), dtype=np.float32)
    cols = np.arange(IMG)
    for b in range(B):
        ref[b, rows[b], cols] = 255.0

    assert img1.shape == (B, IMG, IMG) and img1.dtype == jnp.bfloat16
    assert img3.shape == (B, 3, IMG, IMG)
    assert logits.shape == (B, NUM_CLASSES)
    img1_f32 = np.asarray(img1.astype(jnp.float32))
    assert np.array_equal(img1_f32, ref), "signal-as-image rasterization mismatch"
    assert np.array_equal(np.asarray(img3[:, 0].astype(jnp.float32)),
                          np.asarray(img3[:, 2].astype(jnp.float32))), "channel replication mismatch"
    assert np.allclose(img1_f32.mean(axis=(1, 2)), 255.0 / IMG, rtol=1e-3), "GAP stand-in feature mismatch"

    print("KERNEL_OK")
</pallas_src>

<mosaic_0001>
module attributes {stable_mosaic.version = 11 : i64} {
  func.func @kernel(%arg0: i32, %arg1: memref<4x1x178xf32, #tpu.memory_space<vmem>>, %arg2: memref<4x178x178xbf16, #tpu.memory_space<vmem>>) attributes {dimension_semantics = [#tpu.dimension_semantics<parallel>], iteration_bounds = array<i64: 2>, scalar_prefetch = 0 : i64, scratch_operands = 0 : i64, tpu.core_type = #tpu.core_type<tc>, window_params = [{transform_indices = @transform_0, window_bounds = array<i64: 4, 1, 178>}, {transform_indices = @transform_1, window_bounds = array<i64: 4, 178, 178>}]} {
    %c0 = arith.constant 0 : index
    %c0_0 = arith.constant 0 : index
    %c0_1 = arith.constant 0 : index
    %0 = vector.load %arg1[%c0, %c0_0, %c0_1] : memref<4x1x178xf32, #tpu.memory_space<vmem>>, vector<4x1x178xf32>
    %cst = arith.constant -1.000000e+00 : f32
    %1 = vector.broadcast %cst : f32 to vector<4x1x178xf32>
    %2 = arith.subf %0, %1 : vector<4x1x178xf32>
    %cst_2 = arith.constant 1.780000e+02 : f32
    %3 = vector.broadcast %cst_2 : f32 to vector<4x1x178xf32>
    %4 = arith.mulf %2, %3 : vector<4x1x178xf32>
    %cst_3 = arith.constant 2.000000e+00 : f32
    %5 = vector.broadcast %cst_3 : f32 to vector<4x1x178xf32>
    %6 = arith.divf %4, %5 : vector<4x1x178xf32>
    %7 = math.floor %6 : vector<4x1x178xf32>
    %8 = arith.fptosi %7 : vector<4x1x178xf32> to vector<4x1x178xi32>
    %c177_i32 = arith.constant 177 : i32
    %9 = vector.broadcast %c177_i32 : i32 to vector<4x1x178xi32>
    %10 = arith.subi %9, %8 : vector<4x1x178xi32>
    %c0_i32 = arith.constant 0 : i32
    %11 = vector.broadcast %c0_i32 : i32 to vector<4x1x178xi32>
    %12 = arith.cmpi slt, %10, %11 : vector<4x1x178xi32>
    %c178_i32 = arith.constant 178 : i32
    %13 = vector.broadcast %c178_i32 : i32 to vector<4x1x178xi32>
    %14 = arith.addi %10, %13 : vector<4x1x178xi32>
    %15 = arith.select %12, %14, %10 : vector<4x1x178xi1>, vector<4x1x178xi32>
    %16 = tpu.iota {dimensions = array<i32: 0>} : vector<178x178xi32>
    %17 = vector.shape_cast %16 : vector<178x178xi32> to vector<1x178x178xi32>
    %18 = vector.broadcast %17 : vector<1x178x178xi32> to vector<4x178x178xi32>
    %19 = vector.broadcast %15 : vector<4x1x178xi32> to vector<4x178x178xi32>
    %20 = arith.cmpi eq, %18, %19 : vector<4x178x178xi32>
    %cst_4 = arith.constant 2.550000e+02 : f32
    %cst_5 = arith.constant 0.000000e+00 : f32
    %21 = vector.broadcast %cst_4 : f32 to vector<4x178x178xf32>
    %22 = vector.broadcast %cst_5 : f32 to vector<4x178x178xf32>
    %23 = arith.select %20, %21, %22 : vector<4x178x178xi1>, vector<4x178x178xf32>
    %24 = arith.truncf %23 : vector<4x178x178xf32> to vector<4x178x178xbf16>
    %c0_6 = arith.constant 0 : index
    %c0_7 = arith.constant 0 : index
    %c0_8 = arith.constant 0 : index
    %25 = vector.load %arg2[%c0_6, %c0_7, %c0_8] : memref<4x178x178xbf16, #tpu.memory_space<vmem>>, vector<4x178x178xbf16>
    tpu.vector_store %arg2[%c0_6, %c0_7, %c0_8], %24 {strides = array<i32>} : memref<4x178x178xbf16, #tpu.memory_space<vmem>>, vector<4x178x178xbf16>,
    return
  }
  func.func @transform_0(%arg0: i32) -> (i32, i32, i32) {
    %c0_i32 = arith.constant 0 : i32
    %c0_i32_0 = arith.constant 0 : i32
    %c0_i32_1 = arith.constant 0 : i32
    return %arg0, %c0_i32, %c0_i32_0 : i32, i32, i32
  }
  func.func @transform_1(%arg0: i32) -> (i32, i32, i32) {
    %c0_i32 = arith.constant 0 : i32
    %c0_i32_0 = arith.constant 0 : i32
    %c0_i32_1 = arith.constant 0 : i32
    return %arg0, %c0_i32, %c0_i32_0 : i32, i32, i32
  }
}

</mosaic_0001>

<llo_original>
// kernel: tpu_custom_call.1
$region0: #{tpu_custom_call.1}
  #allocation0 [shape = 'u32[]', space=smem, size = 0x4, offset = 0x4, fixed_abs, tag = 'smem constant byte address 0x4 - core index']
  #allocation1 [shape = 'u32[144,128]{1,0:T(1,128)}', space=vmem, size = 0x12000, scoped, tag = 'internal scratch']
  %s0 = inlined_call_operand.hbm [shape: f32[8,1,178], index: 0, kind: input, shape index: {}]
  %s1 = inlined_call_operand.vmem [shape: bf16[8,178,178], index: 1, kind: output, shape index: {}]
  %s2 = sld [smem:[#allocation0]]
  $region41: #{tpu_custom_call.1} parent=0
    _
  %s4 = ssub.s32 1, %s2
  %s5 = scalar_select 0, %s4, %s2
  $region1: #{tpu_custom_call.1} parent=0
    #allocation2 [shape = 'u8[8192]{0}', space=vmem, size = 0x2000, scoped, tag = 'input window, operand 0']
    #allocation3 [shape = 's32[2]{0}', space=sflag, size = 0x8, scoped, tag = 'scoped memory for tpu_custom_call.1']
    %6 = vsyncpa [#allocation3], 0
    %s7 = scalar_lea.sflag [#allocation3], 1
    %8 = vsyncpa %s7, 0
    loop: start=0, step=1, limit=4
    $region2: #{tpu_custom_call.1} parent=1 // loop_pre_header
      _
    $region3: #{tpu_custom_call.1} parent=1 // loop_header
      %s10 = sphi 0, %s14
      %p11 = scmp.ge.s32.totalorder %s10, 4
      %s20 = sphi 0, %s22
      %s23 = sphi 0, %s20
      %s24 = sphi 0, %s23
      %s40 = sphi 0, %s24
      %s46 = sphi 0, %s48
      %s49 = sphi 0, %s46
      %s50 = sphi 0, %s49
      %s66 = sphi 0, %s50
    $region4: #{tpu_custom_call.1} parent=1 // loop_header_branch
      %13 = sbr.rel (%p11) target = $region8
    $region5: #{tpu_custom_call.1} parent=1 // loop_body
      %s15 = ssub.s32 %s10, 1
      %s16 = ssub.s32 %s10, 2
      %s17 = sadd.s32 %s10, 1
      %s18 = ssub.s32 %s10, %s17
      %p19 = scmp.eq.s32.totalorder %s18, 0
      %s21 = sadd.s32 %s20, 1
      %s22 = scalar_select %p19, %s20, %s21
      %p25 = pneg %p19
      %p26 = scmp.eq.s32.totalorder %s10, 1
      %p27 = por %p25, %p26
      %p28 = scmp.ne.s32.totalorder %s20, %s23
      %p29 = scmp.eq.s32.totalorder %s10, 0
      %p30 = por %p28, %p29
      %p31 = scmp.ne.s32.totalorder %s20, %s23
      %p32 = scmp.eq.s32.totalorder %s15, 1
      %p33 = por %p31, %p32
      %p34 = scmp.ne.s32.totalorder %s23, %s24
      %p35 = scmp.eq.s32.totalorder %s15, 0
      %p36 = por %p34, %p35
      %p37 = scmp.ne.s32.totalorder %s23, %s24
      %p38 = scmp.eq.s32.totalorder %s16, 1
      %p39 = por %p37, %p38
      %p41 = scmp.ne.s32.totalorder %s24, %s40
      %p42 = scmp.eq.s32.totalorder %s16, 0
      %p43 = por %p41, %p42
      %s44 = ssub.s32 %s10, %s17
      %p45 = scmp.eq.s32.totalorder %s44, 0
      %s47 = sadd.s32 %s46, 1
      %s48 = scalar_select %p45, %s46, %s47
      %p51 = pneg %p45
      %p52 = scmp.eq.s32.totalorder %s10, 1
      %p53 = por %p51, %p52
      %p54 = scmp.ne.s32.totalorder %s46, %s49
      %p55 = scmp.eq.s32.totalorder %s10, 0
      %p56 = por %p54, %p55
      %p57 = scmp.ne.s32.totalorder %s46, %s49
      %p58 = scmp.eq.s32.totalorder %s15, 1
      %p59 = por %p57, %p58
      %p60 = scmp.ne.s32.totalorder %s49, %s50
      %p61 = scmp.eq.s32.totalorder %s15, 0
      %p62 = por %p60, %p61
      %p63 = scmp.ne.s32.totalorder %s49, %s50
      %p64 = scmp.eq.s32.totalorder %s16, 1
      %p65 = por %p63, %p64
      %p67 = scmp.ne.s32.totalorder %s50, %s66
      %p68 = scmp.eq.s32.totalorder %s16, 0
      %p69 = por %p67, %p68
      %p70 = scmp.le.s32.totalorder 1, %s10
      %p71 = scmp.lt.s32.totalorder %s10, 3
      %p72 = pnand %p70, %p71
      %p73 = pneg %p72
      // Predicated region
      $region9: #{tpu_custom_call.1} parent=5 // pred_check
        _
      $region10: #{tpu_custom_call.1} parent=5 // pred_check_branch
        %75 = sbr.rel (%p72) target = $region12
      $region11: #{tpu_custom_call.1} parent=5 // pred_region
        %s76 = ssub.s32 %s10, 1
      $region12: #{tpu_custom_call.1} parent=5 // pred_fallthru
        _
      %p77 = scmp.lt.s32.totalorder %s10, 2
      // Predicated region
      $region13: #{tpu_custom_call.1} parent=5 // pred_check
        %p78 = pneg %p77
      $region14: #{tpu_custom_call.1} parent=5 // pred_check_branch
        %80 = sbr.rel (%p78) target = $region16
      $region15: #{tpu_custom_call.1} parent=5 // pred_region
        // Predicated region
        $region17: #{tpu_custom_call.1} parent=15 // pred_check
          %p81 = pneg %p30
        $region18: #{tpu_custom_call.1} parent=15 // pred_check_branch
          %83 = sbr.rel (%p81) target = $region20
        $region19: #{tpu_custom_call.1} parent=15 // pred_region
          %s84 = sand.u32 %s20, 1
          %s85 = scalar_lea.sflag [#allocation3], %s84
          %s86 = sand.u32 %s20, 1
          %s87 = smul.addr %s86, 8
          %s88 = scalar_lea.vmem [#allocation2], %s87
          %s89 = smul.u32 4, %s10
          %s91 = ssub.s32 128, 128
          %92 = vsyncadd %s85, %s91
          %s93 = smul.addr %s89, 2
          %s94 = smul.addr %s93, 16
          %s95 = scalar_lea.hbm %s0, %s94
          %s96 = sshll.u32 %s88, 4
          %s97 = int_to_ptr.vmem [resolvable:$true] %s96
          %102 = dma.hbm_to_vmem [thread:$0]  %s95, 128, %s97, %s85, 32, 32, 2
        $region20: #{tpu_custom_call.1} parent=15 // pred_fallthru
          _
      $region16: #{tpu_custom_call.1} parent=5 // pred_fallthru
        _
      %p103 = scmp.le.s32.totalorder 1, %s10
      %p104 = scmp.lt.s32.totalorder %s10, 3
      %p105 = pnand %p103, %p104
      %p106 = pneg %p105
      // Predicated region
      $region21: #{tpu_custom_call.1} parent=5 // pred_check
        _
      $region22: #{tpu_custom_call.1} parent=5 // pred_check_branch
        %108 = sbr.rel (%p105) target = $region24
      $region23: #{tpu_custom_call.1} parent=5 // pred_region
        %s109 = ssub.s32 %s10, 1
        %s110 = sand.u32 %s23, 1
        %s111 = scalar_lea.sflag [#allocation3], %s110
        %s112 = sand.u32 %s23, 1
        %s113 = smul.addr %s112, 8
        %s114 = scalar_lea.vmem [#allocation2], %s113
        // Predicated region
        $region25: #{tpu_custom_call.1} parent=23 // pred_check
          %p115 = pneg %p36
        $region26: #{tpu_custom_call.1} parent=23 // pred_check_branch
          %117 = sbr.rel (%p115) target = $region28
        $region27: #{tpu_custom_call.1} parent=23 // pred_region
          %118 = dma.done %s111, 128
        $region28: #{tpu_custom_call.1} parent=23 // pred_fallthru
          _
        %s119 = sand.u32 %s23, 1
        %s120 = scalar_lea.sflag [#allocation3], %s119
        %s121 = sand.u32 %s23, 1
        %s122 = smul.addr %s121, 8
        %s123 = scalar_lea.vmem [#allocation2], %s122
        %p124 = pneg %p36
        %p125 = pneg %p33
        %p126 = pneg %p62
        %p127 = pneg %p59
        %s128 = smul.u32 4, %s15
        %p129 = scmp.lt.s32.totalorder %s128, 7
        %s130 = scalar_select %p129, %s128, 7
        %s131 = smul.addr %s130, 46
        %s132 = smul.addr %s131, 4
        %s133 = scalar_lea.vmem %s1, %s132
        %s134 = smul.u32 4, %s15
        %s135 = smul.u32 4, %s15
        %p136 = scmp.lt.s32.totalorder %s135, 7
        %s137 = scalar_select %p136, %s135, 7
        %s138 = smul.addr %s137, 46
        %s139 = smul.addr %s138, 4
        %s140 = scalar_lea.vmem %s1, %s139
        %s141 = smul.u32 4, %s15
        %v142 = vld [vmem:[%s114] sm:$0x3]
        %v143 = vld [vmem:[%s114 + $0x2] sm:$0x3]
        %v144 = vld [vmem:[%s114 + $0x4] sm:$0x3]
        %v145 = vld [vmem:[%s114 + $0x6] sm:$0x3]
        %v146 = vsub.f32 %v142, -1.0
        %v147 = vsub.f32 %v143, -1.0
        %v148 = vsub.f32 %v144, -1.0
        %v149 = vsub.f32 %v145, -1.0
        %v150 = vmul.f32 %v146, 178.0
        %v151 = vmul.f32 %v147, 178.0
        %v152 = vmul.f32 %v148, 178.0
        %v153 = vmul.f32 %v149, 178.0
        %v154 = vrcp.pop 2.0
        %v155 = vmul.f32 %v150, %v154
        %v156 = vmul.f32 %v151, %v154
        %v157 = vmul.f32 %v152, %v154
        %v158 = vmul.f32 %v153, %v154
        %v159 = vfloor.f32 %v155
        %v160 = vfloor.f32 %v156
        %v161 = vfloor.f32 %v157
        %v162 = vfloor.f32 %v158
        %v163 = vcvt.f32.s32.to.zero.pseudo %v159
        %v164 = vcvt.f32.s32.to.zero.pseudo %v160
        %v165 = vcvt.f32.s32.to.zero.pseudo %v161
        %v166 = vcvt.f32.s32.to.zero.pseudo %v162
        %v167 = vsub.s32 177, %v163
        %v168 = vsub.s32 177, %v164
        %v169 = vsub.s32 177, %v165
        %v170 = vsub.s32 177, %v166
        %vm171 = vcmp.lt.s32.totalorder %v167, 0
        %vm172 = vcmp.lt.s32.totalorder %v168, 0
        %vm173 = vcmp.lt.s32.totalorder %v169, 0
        %vm174 = vcmp.lt.s32.totalorder %v170, 0
        %v175 = vadd.s32 %v167, 178
        %v176 = vadd.s32 %v168, 178
        %v177 = vadd.s32 %v169, 178
        %v178 = vadd.s32 %v170, 178
        %v179 = vsel %vm171, %v175, %v167
        %v180 = vsel %vm172, %v176, %v168
        %v181 = vsel %vm173, %v177, %v169
        %v182 = vsel %vm174, %v178, %v170
        %v183 = vlaneseq
        %v184 = vshrl.u32 %v183, 7
        %v185 = vadd.s32 %v184, 8
        %v186 = vadd.s32 %v184, 16
        %v187 = vadd.s32 %v184, 24
        %v188 = vadd.s32 %v184, 32
        %v189 = vadd.s32 %v184, 40
        %v190 = vadd.s32 %v184, 48
        %v191 = vadd.s32 %v184, 56
        %v192 = vadd.s32 %v184, 64
        %v193 = vadd.s32 %v184, 72
        %v194 = vadd.s32 %v184, 80
        %v195 = vadd.s32 %v184, 88
        %v196 = vadd.s32 %v184, 96
        %v197 = vadd.s32 %v184, 104
        %v198 = vadd.s32 %v184, 112
        %v199 = vadd.s32 %v184, 120
        %v200 = vadd.s32 %v184, 128
        %v201 = vadd.s32 %v184, 136
        %v202 = vadd.s32 %v184, 144
        %v203 = vadd.s32 %v184, 152
        %v204 = vadd.s32 %v184, 160
        %v205 = vadd.s32 %v184, 168
        %v206 = vadd.s32 %v184, 176
        %v207 = vlaneseq
        %v208 = vshrl.u32 %v207, 7
        %v209 = vsub.s32 0, %v208
        %v210 = vrot.slane %v179, %v209
        %v211 = vlaneseq
        %v212 = vshrl.u32 %v211, 7
        %v213 = vsub.s32 1, %v212
        %v214 = vrot.slane %v179, %v213
        %v215 = vlaneseq
        %v216 = vshrl.u32 %v215, 7
        %v217 = vsub.s32 0, %v216
        %v218 = vrot.slane %v180, %v217
        %v219 = vlaneseq
        %v220 = vshrl.u32 %v219, 7
        %v221 = vsub.s32 1, %v220
        %v222 = vrot.slane %v180, %v221
        %v223 = vlaneseq
        %v224 = vshrl.u32 %v223, 7
        %v225 = vsub.s32 0, %v224
        %v226 = vrot.slane %v181, %v225
        %v227 = vlaneseq
        %v228 = vshrl.u32 %v227, 7
        %v229 = vsub.s32 1, %v228
        %v230 = vrot.slane %v181, %v229
        %v231 = vlaneseq
        %v232 = vshrl.u32 %v231, 7
        %v233 = vsub.s32 0, %v232
        %v234 = vrot.slane %v182, %v233
        %v235 = vlaneseq
        %v236 = vshrl.u32 %v235, 7
        %v237 = vsub.s32 1, %v236
        %v238 = vrot.slane %v182, %v237
        %vm239 = vcmp.eq.s32.totalorder %v184, %v210
        %vm240 = vcmp.eq.s32.totalorder %v184, %v214
        %vm241 = vcmp.eq.s32.totalorder %v185, %v210
        %vm242 = vcmp.eq.s32.totalorder %v185, %v214
        %vm243 = vcmp.eq.s32.totalorder %v186, %v210
        %vm244 = vcmp.eq.s32.totalorder %v186, %v214
        %vm245 = vcmp.eq.s32.totalorder %v187, %v210
        %vm246 = vcmp.eq.s32.totalorder %v187, %v214
        %vm247 = vcmp.eq.s32.totalorder %v188, %v210
        %vm248 = vcmp.eq.s32.totalorder %v188, %v214
        %vm249 = vcmp.eq.s32.totalorder %v189, %v210
        %vm250 = vcmp.eq.s32.totalorder %v189, %v214
        %vm251 = vcmp.eq.s32.totalorder %v190, %v210
        %vm252 = vcmp.eq.s32.totalorder %v190, %v214
        %vm253 = vcmp.eq.s32.totalorder %v191, %v210
        %vm254 = vcmp.eq.s32.totalorder %v191, %v214
        %vm255 = vcmp.eq.s32.totalorder %v192, %v210
        %vm256 = vcmp.eq.s32.totalorder %v192, %v214
        %vm257 = vcmp.eq.s32.totalorder %v193, %v210
        %vm258 = vcmp.eq.s32.totalorder %v193, %v214
        %vm259 = vcmp.eq.s32.totalorder %v194, %v210
        %vm260 = vcmp.eq.s32.totalorder %v194, %v214
        %vm261 = vcmp.eq.s32.totalorder %v195, %v210
        %vm262 = vcmp.eq.s32.totalorder %v195, %v214
        %vm263 = vcmp.eq.s32.totalorder %v196, %v210
        %vm264 = vcmp.eq.s32.totalorder %v196, %v214
        %vm265 = vcmp.eq.s32.totalorder %v197, %v210
        %vm266 = vcmp.eq.s32.totalorder %v197, %v214
        %vm267 = vcmp.eq.s32.totalorder %v198, %v210
        %vm268 = vcmp.eq.s32.totalorder %v198, %v214
        %vm269 = vcmp.eq.s32.totalorder %v199, %v210
        %vm270 = vcmp.eq.s32.totalorder %v199, %v214
        %vm271 = vcmp.eq.s32.totalorder %v200, %v210
        %vm272 = vcmp.eq.s32.totalorder %v200, %v214
        %vm273 = vcmp.eq.s32.totalorder %v201, %v210
        %vm274 = vcmp.eq.s32.totalorder %v201, %v214
        %vm275 = vcmp.eq.s32.totalorder %v202, %v210
        %vm276 = vcmp.eq.s32.totalorder %v202, %v214
        %vm277 = vcmp.eq.s32.totalorder %v203, %v210
        %vm278 = vcmp.eq.s32.totalorder %v203, %v214
        %vm279 = vcmp.eq.s32.totalorder %v204, %v210
        %vm280 = vcmp.eq.s32.totalorder %v204, %v214
        %vm281 = vcmp.eq.s32.totalorder %v205, %v210
        %vm282 = vcmp.eq.s32.totalorder %v205, %v214
        %vm283 = vcmp.eq.s32.totalorder %v206, %v210
        %vm284 = vcmp.eq.s32.totalorder %v206, %v214
        %vm285 = vcmp.eq.s32.totalorder %v184, %v218
        %vm286 = vcmp.eq.s32.totalorder %v184, %v222
        %vm287 = vcmp.eq.s32.totalorder %v185, %v218
        %vm288 = vcmp.eq.s32.totalorder %v185, %v222
        %vm289 = vcmp.eq.s32.totalorder %v186, %v218
        %vm290 = vcmp.eq.s32.totalorder %v186, %v222
        %vm291 = vcmp.eq.s32.totalorder %v187, %v218
        %vm292 = vcmp.eq.s32.totalorder %v187, %v222
        %vm293 = vcmp.eq.s32.totalorder %v188, %v218
        %vm294 = vcmp.eq.s32.totalorder %v188, %v222
        %vm295 = vcmp.eq.s32.totalorder %v189, %v218
        %vm296 = vcmp.eq.s32.totalorder %v189, %v222
        %vm297 = vcmp.eq.s32.totalorder %v190, %v218
        %vm298 = vcmp.eq.s32.totalorder %v190, %v222
        %vm299 = vcmp.eq.s32.totalorder %v191, %v218
        %vm300 = vcmp.eq.s32.totalorder %v191, %v222
        %vm301 = vcmp.eq.s32.totalorder %v192, %v218
        %vm302 = vcmp.eq.s32.totalorder %v192, %v222
        %vm303 = vcmp.eq.s32.totalorder %v193, %v218
        %vm304 = vcmp.eq.s32.totalorder %v193, %v222
        %vm305 = vcmp.eq.s32.totalorder %v194, %v218
        %vm306 = vcmp.eq.s32.totalorder %v194, %v222
        %vm307 = vcmp.eq.s32.totalorder %v195, %v218
        %vm308 = vcmp.eq.s32.totalorder %v195, %v222
        %vm309 = vcmp.eq.s32.totalorder %v196, %v218
        %vm310 = vcmp.eq.s32.totalorder %v196, %v222
        %vm311 = vcmp.eq.s32.totalorder %v197, %v218
        %vm312 = vcmp.eq.s32.totalorder %v197, %v222
        %vm313 = vcmp.eq.s32.totalorder %v198, %v218
        %vm314 = vcmp.eq.s32.totalorder %v198, %v222
        %vm315 = vcmp.eq.s32.totalorder %v199, %v218
        %vm316 = vcmp.eq.s32.totalorder %v199, %v222
        %vm317 = vcmp.eq.s32.totalorder %v200, %v218
        %vm318 = vcmp.eq.s32.totalorder %v200, %v222
        %vm319 = vcmp.eq.s32.totalorder %v201, %v218
        %vm320 = vcmp.eq.s32.totalorder %v201, %v222
        %vm321 = vcmp.eq.s32.totalorder %v202, %v218
        %vm322 = vcmp.eq.s32.totalorder %v202, %v222
        %vm323 = vcmp.eq.s32.totalorder %v203, %v218
        %vm324 = vcmp.eq.s32.totalorder %v203, %v222
        %vm325 = vcmp.eq.s32.totalorder %v204, %v218
        %vm326 = vcmp.eq.s32.totalorder %v204, %v222
        %vm327 = vcmp.eq.s32.totalorder %v205, %v218
        %vm328 = vcmp.eq.s32.totalorder %v205, %v222
        %vm329 = vcmp.eq.s32.totalorder %v206, %v218
        %vm330 = vcmp.eq.s32.totalorder %v206, %v222
        %vm331 = vcmp.eq.s32.totalorder %v184, %v226
        %vm332 = vcmp.eq.s32.totalorder %v184, %v230
        %vm333 = vcmp.eq.s32.totalorder %v185, %v226
        %vm334 = vcmp.eq.s32.totalorder %v185, %v230
        %vm335 = vcmp.eq.s32.totalorder %v186, %v226
        %vm336 = vcmp.eq.s32.totalorder %v186, %v230
        %vm337 = vcmp.eq.s32.totalorder %v187, %v226
        %vm338 = vcmp.eq.s32.totalorder %v187, %v230
        %vm339 = vcmp.eq.s32.totalorder %v188, %v226
        %vm340 = vcmp.eq.s32.totalorder %v188, %v230
        %vm341 = vcmp.eq.s32.totalorder %v189, %v226
        %vm342 = vcmp.eq.s32.totalorder %v189, %v230
        %vm343 = vcmp.eq.s32.totalorder %v190, %v226
        %vm344 = vcmp.eq.s32.totalorder %v190, %v230
        %vm345 = vcmp.eq.s32.totalorder %v191, %v226
        %vm346 = vcmp.eq.s32.totalorder %v191, %v230
        %vm347 = vcmp.eq.s32.totalorder %v192, %v226
        %vm348 = vcmp.eq.s32.totalorder %v192, %v230
        %vm349 = vcmp.eq.s32.totalorder %v193, %v226
        %vm350 = vcmp.eq.s32.totalorder %v193, %v230
        %vm351 = vcmp.eq.s32.totalorder %v194, %v226
        %vm352 = vcmp.eq.s32.totalorder %v194, %v230
        %vm353 = vcmp.eq.s32.totalorder %v195, %v226
        %vm354 = vcmp.eq.s32.totalorder %v195, %v230
        %vm355 = vcmp.eq.s32.totalorder %v196, %v226
        %vm356 = vcmp.eq.s32.totalorder %v196, %v230
        %vm357 = vcmp.eq.s32.totalorder %v197, %v226
        %vm358 = vcmp.eq.s32.totalorder %v197, %v230
        %vm359 = vcmp.eq.s32.totalorder %v198, %v226
        %vm360 = vcmp.eq.s32.totalorder %v198, %v230
        %vm361 = vcmp.eq.s32.totalorder %v199, %v226
        %vm362 = vcmp.eq.s32.totalorder %v199, %v230
        %vm363 = vcmp.eq.s32.totalorder %v200, %v226
        %vm364 = vcmp.eq.s32.totalorder %v200, %v230
        %vm365 = vcmp.eq.s32.totalorder %v201, %v226
        %vm366 = vcmp.eq.s32.totalorder %v201, %v230
        %vm367 = vcmp.eq.s32.totalorder %v202, %v226
        %vm368 = vcmp.eq.s32.totalorder %v202, %v230
        %vm369 = vcmp.eq.s32.totalorder %v203, %v226
        %vm370 = vcmp.eq.s32.totalorder %v203, %v230
        %vm371 = vcmp.eq.s32.totalorder %v204, %v226
        %vm372 = vcmp.eq.s32.totalorder %v204, %v230
        %vm373 = vcmp.eq.s32.totalorder %v205, %v226
        %vm374 = vcmp.eq.s32.totalorder %v205, %v230
        %vm375 = vcmp.eq.s32.totalorder %v206, %v226
        %vm376 = vcmp.eq.s32.totalorder %v206, %v230
        %vm377 = vcmp.eq.s32.totalorder %v184, %v234
        %vm378 = vcmp.eq.s32.totalorder %v184, %v238
        %vm379 = vcmp.eq.s32.totalorder %v185, %v234
        %vm380 = vcmp.eq.s32.totalorder %v185, %v238
        %vm381 = vcmp.eq.s32.totalorder %v186, %v234
        %vm382 = vcmp.eq.s32.totalorder %v186, %v238
        %vm383 = vcmp.eq.s32.totalorder %v187, %v234
        %vm384 = vcmp.eq.s32.totalorder %v187, %v238
        %vm385 = vcmp.eq.s32.totalorder %v188, %v234
        %vm386 = vcmp.eq.s32.totalorder %v188, %v238
        %vm387 = vcmp.eq.s32.totalorder %v189, %v234
        %vm388 = vcmp.eq.s32.totalorder %v189, %v238
        %vm389 = vcmp.eq.s32.totalorder %v190, %v234
        %vm390 = vcmp.eq.s32.totalorder %v190, %v238
        %vm391 = vcmp.eq.s32.totalorder %v191, %v234
        %vm392 = vcmp.eq.s32.totalorder %v191, %v238
        %vm393 = vcmp.eq.s32.totalorder %v192, %v234
        %vm394 = vcmp.eq.s32.totalorder %v192, %v238
        %vm395 = vcmp.eq.s32.totalorder %v193, %v234
        %vm396 = vcmp.eq.s32.totalorder %v193, %v238
        %vm397 = vcmp.eq.s32.totalorder %v194, %v234
        %vm398 = vcmp.eq.s32.totalorder %v194, %v238
        %vm399 = vcmp.eq.s32.totalorder %v195, %v234
        %vm400 = vcmp.eq.s32.totalorder %v195, %v238
        %vm401 = vcmp.eq.s32.totalorder %v196, %v234
        %vm402 = vcmp.eq.s32.totalorder %v196, %v238
        %vm403 = vcmp.eq.s32.totalorder %v197, %v234
        %vm404 = vcmp.eq.s32.totalorder %v197, %v238
        %vm405 = vcmp.eq.s32.totalorder %v198, %v234
        %vm406 = vcmp.eq.s32.totalorder %v198, %v238
        %vm407 = vcmp.eq.s32.totalorder %v199, %v234
        %vm408 = vcmp.eq.s32.totalorder %v199, %v238
        %vm409 = vcmp.eq.s32.totalorder %v200, %v234
        %vm410 = vcmp.eq.s32.totalorder %v200, %v238
        %vm411 = vcmp.eq.s32.totalorder %v201, %v234
        %vm412 = vcmp.eq.s32.totalorder %v201, %v238
        %vm413 = vcmp.eq.s32.totalorder %v202, %v234
        %vm414 = vcmp.eq.s32.totalorder %v202, %v238
        %vm415 = vcmp.eq.s32.totalorder %v203, %v234
        %vm416 = vcmp.eq.s32.totalorder %v203, %v238
        %vm417 = vcmp.eq.s32.totalorder %v204, %v234
        %vm418 = vcmp.eq.s32.totalorder %v204, %v238
        %vm419 = vcmp.eq.s32.totalorder %v205, %v234
        %vm420 = vcmp.eq.s32.totalorder %v205, %v238
        %vm421 = vcmp.eq.s32.totalorder %v206, %v234
        %vm422 = vcmp.eq.s32.totalorder %v206, %v238
        %v423 = vsel %vm239, 255.0, 0.0
        %v424 = vsel %vm240, 255.0, 0.0
        %v425 = vsel %vm241, 255.0, 0.0
        %v426 = vsel %vm242, 255.0, 0.0
        %v427 = vsel %vm243, 255.0, 0.0
        %v428 = vsel %vm244, 255.0, 0.0
        %v429 = vsel %vm245, 255.0, 0.0
        %v430 = vsel %vm246, 255.0, 0.0
        %v431 = vsel %vm247, 255.0, 0.0
        %v432 = vsel %vm248, 255.0, 0.0
        %v433 = vsel %vm249, 255.0, 0.0
        %v434 = vsel %vm250, 255.0, 0.0
        %v435 = vsel %vm251, 255.0, 0.0
        %v436 = vsel %vm252, 255.0, 0.0
        %v437 = vsel %vm253, 255.0, 0.0
        %v438 = vsel %vm254, 255.0, 0.0
        %v439 = vsel %vm255, 255.0, 0.0
        %v440 = vsel %vm256, 255.0, 0.0
        %v441 = vsel %vm257, 255.0, 0.0
        %v442 = vsel %vm258, 255.0, 0.0
        %v443 = vsel %vm259, 255.0, 0.0
        %v444 = vsel %vm260, 255.0, 0.0
        %v445 = vsel %vm261, 255.0, 0.0
        %v446 = vsel %vm262, 255.0, 0.0
        %v447 = vsel %vm263, 255.0, 0.0
        %v448 = vsel %vm264, 255.0, 0.0
        %v449 = vsel %vm265, 255.0, 0.0
        %v450 = vsel %vm266, 255.0, 0.0
        %v451 = vsel %vm267, 255.0, 0.0
        %v452 = vsel %vm268, 255.0, 0.0
        %v453 = vsel %vm269, 255.0, 0.0
        %v454 = vsel %vm270, 255.0, 0.0
        %v455 = vsel %vm271, 255.0, 0.0
        %v456 = vsel %vm272, 255.0, 0.0
        %v457 = vsel %vm273, 255.0, 0.0
        %v458 = vsel %vm274, 255.0, 0.0
        %v459 = vsel %vm275, 255.0, 0.0
        %v460 = vsel %vm276, 255.0, 0.0
        %v461 = vsel %vm277, 255.0, 0.0
        %v462 = vsel %vm278, 255.0, 0.0
        %v463 = vsel %vm279, 255.0, 0.0
        %v464 = vsel %vm280, 255.0, 0.0
        %v465 = vsel %vm281, 255.0, 0.0
        %v466 = vsel %vm282, 255.0, 0.0
        %v467 = vsel %vm283, 255.0, 0.0
        %v468 = vsel %vm284, 255.0, 0.0
        %v469 = vsel %vm285, 255.0, 0.0
        %v470 = vsel %vm286, 255.0, 0.0
        %v471 = vsel %vm287, 255.0, 0.0
        %v472 = vsel %vm288, 255.0, 0.0
        %v473 = vsel %vm289, 255.0, 0.0
        %v474 = vsel %vm290, 255.0, 0.0
        %v475 = vsel %vm291, 255.0, 0.0
        %v476 = vsel %vm292, 255.0, 0.0
        %v477 = vsel %vm293, 255.0, 0.0
        %v478 = vsel %vm294, 255.0, 0.0
        %v479 = vsel %vm295, 255.0, 0.0
        %v480 = vsel %vm296, 255.0, 0.0
        %v481 = vsel %vm297, 255.0, 0.0
        %v482 = vsel %vm298, 255.0, 0.0
        %v483 = vsel %vm299, 255.0, 0.0
        %v484 = vsel %vm300, 255.0, 0.0
        %v485 = vsel %vm301, 255.0, 0.0
        %v486 = vsel %vm302, 255.0, 0.0
        %v487 = vsel %vm303, 255.0, 0.0
        %v488 = vsel %vm304, 255.0, 0.0
        %v489 = vsel %vm305, 255.0, 0.0
        %v490 = vsel %vm306, 255.0, 0.0
        %v491 = vsel %vm307, 255.0, 0.0
        %v492 = vsel %vm308, 255.0, 0.0
        %v493 = vsel %vm309, 255.0, 0.0
        %v494 = vsel %vm310, 255.0, 0.0
        %v495 = vsel %vm311, 255.0, 0.0
        %v496 = vsel %vm312, 255.0, 0.0
        %v497 = vsel %vm313, 255.0, 0.0
        %v498 = vsel %vm314, 255.0, 0.0
        %v499 = vsel %vm315, 255.0, 0.0
        %v500 = vsel %vm316, 255.0, 0.0
        %v501 = vsel %vm317, 255.0, 0.0
        %v502 = vsel %vm318, 255.0, 0.0
        %v503 = vsel %vm319, 255.0, 0.0
        %v504 = vsel %vm320, 255.0, 0.0
        %v505 = vsel %vm321, 255.0, 0.0
        %v506 = vsel %vm322, 255.0, 0.0
        %v507 = vsel %vm323, 255.0, 0.0
        %v508 = vsel %vm324, 255.0, 0.0
        %v509 = vsel %vm325, 255.0, 0.0
        %v510 = vsel %vm326, 255.0, 0.0
        %v511 = vsel %vm327, 255.0, 0.0
        %v512 = vsel %vm328, 255.0, 0.0
        %v513 = vsel %vm329, 255.0, 0.0
        %v514 = vsel %vm330, 255.0, 0.0
        %v515 = vsel %vm331, 255.0, 0.0
        %v516 = vsel %vm332, 255.0, 0.0
        %v517 = vsel %vm333, 255.0, 0.0
        %v518 = vsel %vm334, 255.0, 0.0
        %v519 = vsel %vm335, 255.0, 0.0
        %v520 = vsel %vm336, 255.0, 0.0
        %v521 = vsel %vm337, 255.0, 0.0
        %v522 = vsel %vm338, 255.0, 0.0
        %v523 = vsel %vm339, 255.0, 0.0
        %v524 = vsel %vm340, 255.0, 0.0
        %v525 = vsel %vm341, 255.0, 0.0
        %v526 = vsel %vm342, 255.0, 0.0
        %v527 = vsel %vm343, 255.0, 0.0
        %v528 = vsel %vm344, 255.0, 0.0
        %v529 = vsel %vm345, 255.0, 0.0
        %v530 = vsel %vm346, 255.0, 0.0
        %v531 = vsel %vm347, 255.0, 0.0
        %v532 = vsel %vm348, 255.0, 0.0
        %v533 = vsel %vm349, 255.0, 0.0
        %v534 = vsel %vm350, 255.0, 0.0
        %v535 = vsel %vm351, 255.0, 0.0
        %v536 = vsel %vm352, 255.0, 0.0
        %v537 = vsel %vm353, 255.0, 0.0
        %v538 = vsel %vm354, 255.0, 0.0
        %v539 = vsel %vm355, 255.0, 0.0
        %v540 = vsel %vm356, 255.0, 0.0
        %v541 = vsel %vm357, 255.0, 0.0
        %v542 = vsel %vm358, 255.0, 0.0
        %v543 = vsel %vm359, 255.0, 0.0
        %v544 = vsel %vm360, 255.0, 0.0
        %v545 = vsel %vm361, 255.0, 0.0
        %v546 = vsel %vm362, 255.0, 0.0
        %v547 = vsel %vm363, 255.0, 0.0
        %v548 = vsel %vm364, 255.0, 0.0
        %v549 = vsel %vm365, 255.0, 0.0
        %v550 = vsel %vm366, 255.0, 0.0
        %v551 = vsel %vm367, 255.0, 0.0
        %v552 = vsel %vm368, 255.0, 0.0
        %v553 = vsel %vm369, 255.0, 0.0
        %v554 = vsel %vm370, 255.0, 0.0
        %v555 = vsel %vm371, 255.0, 0.0
        %v556 = vsel %vm372, 255.0, 0.0
        %v557 = vsel %vm373, 255.0, 0.0
        %v558 = vsel %vm374, 255.0, 0.0
        %v559 = vsel %vm375, 255.0, 0.0
        %v560 = vsel %vm376, 255.0, 0.0
        %v561 = vsel %vm377, 255.0, 0.0
        %v562 = vsel %vm378, 255.0, 0.0
        %v563 = vsel %vm379, 255.0, 0.0
        %v564 = vsel %vm380, 255.0, 0.0
        %v565 = vsel %vm381, 255.0, 0.0
        %v566 = vsel %vm382, 255.0, 0.0
        %v567 = vsel %vm383, 255.0, 0.0
        %v568 = vsel %vm384, 255.0, 0.0
        %v569 = vsel %vm385, 255.0, 0.0
        %v570 = vsel %vm386, 255.0, 0.0
        %v571 = vsel %vm387, 255.0, 0.0
        %v572 = vsel %vm388, 255.0, 0.0
        %v573 = vsel %vm389, 255.0, 0.0
        %v574 = vsel %vm390, 255.0, 0.0
        %v575 = vsel %vm391, 255.0, 0.0
        %v576 = vsel %vm392, 255.0, 0.0
        %v577 = vsel %vm393, 255.0, 0.0
        %v578 = vsel %vm394, 255.0, 0.0
        %v579 = vsel %vm395, 255.0, 0.0
        %v580 = vsel %vm396, 255.0, 0.0
        %v581 = vsel %vm397, 255.0, 0.0
        %v582 = vsel %vm398, 255.0, 0.0
        %v583 = vsel %vm399, 255.0, 0.0
        %v584 = vsel %vm400, 255.0, 0.0
        %v585 = vsel %vm401, 255.0, 0.0
        %v586 = vsel %vm402, 255.0, 0.0
        %v587 = vsel %vm403, 255.0, 0.0
        %v588 = vsel %vm404, 255.0, 0.0
        %v589 = vsel %vm405, 255.0, 0.0
        %v590 = vsel %vm406, 255.0, 0.0
        %v591 = vsel %vm407, 255.0, 0.0
        %v592 = vsel %vm408, 255.0, 0.0
        %v593 = vsel %vm409, 255.0, 0.0
        %v594 = vsel %vm410, 255.0, 0.0
        %v595 = vsel %vm411, 255.0, 0.0
        %v596 = vsel %vm412, 255.0, 0.0
        %v597 = vsel %vm413, 255.0, 0.0
        %v598 = vsel %vm414, 255.0, 0.0
        %v599 = vsel %vm415, 255.0, 0.0
        %v600 = vsel %vm416, 255.0, 0.0
        %v601 = vsel %vm417, 255.0, 0.0
        %v602 = vsel %vm418, 255.0, 0.0
        %v603 = vsel %vm419, 255.0, 0.0
        %v604 = vsel %vm420, 255.0, 0.0
        %v605 = vsel %vm421, 255.0, 0.0
        %v606 = vsel %vm422, 255.0, 0.0
        %v607 = vpack.c.bf16 %v425, %v423
        %v608 = vpack.c.bf16 %v426, %v424
        %v609 = vpack.c.bf16 %v429, %v427
        %v610 = vpack.c.bf16 %v430, %v428
        %v611 = vpack.c.bf16 %v433, %v431
        %v612 = vpack.c.bf16 %v434, %v432
        %v613 = vpack.c.bf16 %v437, %v435
        %v614 = vpack.c.bf16 %v438, %v436
        %v615 = vpack.c.bf16 %v441, %v439
        %v616 = vpack.c.bf16 %v442, %v440
        %v617 = vpack.c.bf16 %v445, %v443
        %v618 = vpack.c.bf16 %v446, %v444
        %v619 = vpack.c.bf16 %v449, %v447
        %v620 = vpack.c.bf16 %v450, %v448
        %v621 = vpack.c.bf16 %v453, %v451
        %v622 = vpack.c.bf16 %v454, %v452
        %v623 = vpack.c.bf16 %v457, %v455
        %v624 = vpack.c.bf16 %v458, %v456
        %v625 = vpack.c.bf16 %v461, %v459
        %v626 = vpack.c.bf16 %v462, %v460
        %v627 = vpack.c.bf16 %v465, %v463
        %v628 = vpack.c.bf16 %v466, %v464
        %v629 = vpack.c.bf16 %v467, %v467
        %v630 = vpack.c.bf16 %v468, %v468
        %v631 = vpack.c.bf16 %v471, %v469
        %v632 = vpack.c.bf16 %v472, %v470
        %v633 = vpack.c.bf16 %v475, %v473
        %v634 = vpack.c.bf16 %v476, %v474
        %v635 = vpack.c.bf16 %v479, %v477
        %v636 = vpack.c.bf16 %v480, %v478
        %v637 = vpack.c.bf16 %v483, %v481
        %v638 = vpack.c.bf16 %v484, %v482
        %v639 = vpack.c.bf16 %v487, %v485
        %v640 = vpack.c.bf16 %v488, %v486
        %v641 = vpack.c.bf16 %v491, %v489
        %v642 = vpack.c.bf16 %v492, %v490
        %v643 = vpack.c.bf16 %v495, %v493
        %v644 = vpack.c.bf16 %v496, %v494
        %v645 = vpack.c.bf16 %v499, %v497
        %v646 = vpack.c.bf16 %v500, %v498
        %v647 = vpack.c.bf16 %v503, %v501
        %v648 = vpack.c.bf16 %v504, %v502
        %v649 = vpack.c.bf16 %v507, %v505
        %v650 = vpack.c.bf16 %v508, %v506
        %v651 = vpack.c.bf16 %v511, %v509
        %v652 = vpack.c.bf16 %v512, %v510
        %v653 = vpack.c.bf16 %v513, %v513
        %v654 = vpack.c.bf16 %v514, %v514
        %v655 = vpack.c.bf16 %v517, %v515
        %v656 = vpack.c.bf16 %v518, %v516
        %v657 = vpack.c.bf16 %v521, %v519
        %v658 = vpack.c.bf16 %v522, %v520
        %v659 = vpack.c.bf16 %v525, %v523
        %v660 = vpack.c.bf16 %v526, %v524
        %v661 = vpack.c.bf16 %v529, %v527
        %v662 = vpack.c.bf16 %v530, %v528
        %v663 = vpack.c.bf16 %v533, %v531
        %v664 = vpack.c.bf16 %v534, %v532
        %v665 = vpack.c.bf16 %v537, %v535
        %v666 = vpack.c.bf16 %v538, %v536
        %v667 = vpack.c.bf16 %v541, %v539
        %v668 = vpack.c.bf16 %v542, %v540
        %v669 = vpack.c.bf16 %v545, %v543
        %v670 = vpack.c.bf16 %v546, %v544
        %v671 = vpack.c.bf16 %v549, %v547
        %v672 = vpack.c.bf16 %v550, %v548
        %v673 = vpack.c.bf16 %v553, %v551
        %v674 = vpack.c.bf16 %v554, %v552
        %v675 = vpack.c.bf16 %v557, %v555
        %v676 = vpack.c.bf16 %v558, %v556
        %v677 = vpack.c.bf16 %v559, %v559
        %v678 = vpack.c.bf16 %v560, %v560
        %v679 = vpack.c.bf16 %v563, %v561
        %v680 = vpack.c.bf16 %v564, %v562
        %v681 = vpack.c.bf16 %v567, %v565
        %v682 = vpack.c.bf16 %v568, %v566
        %v683 = vpack.c.bf16 %v571, %v569
        %v684 = vpack.c.bf16 %v572, %v570
        %v685 = vpack.c.bf16 %v575, %v573
        %v686 = vpack.c.bf16 %v576, %v574
        %v687 = vpack.c.bf16 %v579, %v577
        %v688 = vpack.c.bf16 %v580, %v578
        %v689 = vpack.c.bf16 %v583, %v581
        %v690 = vpack.c.bf16 %v584, %v582
        %v691 = vpack.c.bf16 %v587, %v585
        %v692 = vpack.c.bf16 %v588, %v586
        %v693 = vpack.c.bf16 %v591, %v589
        %v694 = vpack.c.bf16 %v592, %v590
        %v695 = vpack.c.bf16 %v595, %v593
        %v696 = vpack.c.bf16 %v596, %v594
        %v697 = vpack.c.bf16 %v599, %v597
        %v698 = vpack.c.bf16 %v600, %v598
        %v699 = vpack.c.bf16 %v603, %v601
        %v700 = vpack.c.bf16 %v604, %v602
        %v701 = vpack.c.bf16 %v605, %v605
        %v702 = vpack.c.bf16 %v606, %v606
        %v799 = vunpack.c.l.b16 %v607
        %v800 = vunpack.c.l.b16 %v608
        %v801 = vunpack.c.h.b16 %v607
        %v802 = vunpack.c.h.b16 %v608
        %v803 = vunpack.c.l.b16 %v609
        %v804 = vunpack.c.l.b16 %v610
        %v805 = vunpack.c.h.b16 %v609
        %v806 = vunpack.c.h.b16 %v610
        %v807 = vunpack.c.l.b16 %v611
        %v808 = vunpack.c.l.b16 %v612
        %v809 = vunpack.c.h.b16 %v611
        %v810 = vunpack.c.h.b16 %v612
        %v811 = vunpack.c.l.b16 %v613
        %v812 = vunpack.c.l.b16 %v614
        %v813 = vunpack.c.h.b16 %v613
        %v814 = vunpack.c.h.b16 %v614
        %v815 = vunpack.c.l.b16 %v615
        %v816 = vunpack.c.l.b16 %v616
        %v817 = vunpack.c.h.b16 %v615
        %v818 = vunpack.c.h.b16 %v616
        %v819 = vunpack.c.l.b16 %v617
        %v820 = vunpack.c.l.b16 %v618
        %v821 = vunpack.c.h.b16 %v617
        %v822 = vunpack.c.h.b16 %v618
        %v823 = vunpack.c.l.b16 %v619
        %v824 = vunpack.c.l.b16 %v620
        %v825 = vunpack.c.h.b16 %v619
        %v826 = vunpack.c.h.b16 %v620
        %v827 = vunpack.c.l.b16 %v621
        %v828 = vunpack.c.l.b16 %v622
        %v829 = vunpack.c.h.b16 %v621
        %v830 = vunpack.c.h.b16 %v622
        %v831 = vunpack.c.l.b16 %v623
        %v832 = vunpack.c.l.b16 %v624
        %v833 = vunpack.c.h.b16 %v623
        %v834 = vunpack.c.h.b16 %v624
        %v835 = vunpack.c.l.b16 %v625
        %v836 = vunpack.c.l.b16 %v626
        %v837 = vunpack.c.h.b16 %v625
        %v838 = vunpack.c.h.b16 %v626
        %v839 = vunpack.c.l.b16 %v627
        %v840 = vunpack.c.l.b16 %v628
        %v841 = vunpack.c.h.b16 %v627
        %v842 = vunpack.c.h.b16 %v628
        %v843 = vunpack.c.l.b16 %v629
        %v844 = vunpack.c.l.b16 %v630
        %v845 = vunpack.c.l.b16 %v631
        %v846 = vunpack.c.l.b16 %v632
        %v847 = vunpack.c.h.b16 %v631
        %v848 = vunpack.c.h.b16 %v632
        %v849 = vunpack.c.l.b16 %v633
        %v850 = vunpack.c.l.b16 %v634
        %v851 = vunpack.c.h.b16 %v633
        %v852 = vunpack.c.h.b16 %v634
        %v853 = vunpack.c.l.b16 %v635
        %v854 = vunpack.c.l.b16 %v636
        %v855 = vunpack.c.h.b16 %v635
        %v856 = vunpack.c.h.b16 %v636
        %v857 = vunpack.c.l.b16 %v637
        %v858 = vunpack.c.l.b16 %v638
        %v859 = vunpack.c.h.b16 %v637
        %v860 = vunpack.c.h.b16 %v638
        %v861 = vunpack.c.l.b16 %v639
        %v862 = vunpack.c.l.b16 %v640
        %v863 = vunpack.c.h.b16 %v639
        %v864 = vunpack.c.h.b16 %v640
        %v865 = vunpack.c.l.b16 %v641
        %v866 = vunpack.c.l.b16 %v642
        %v867 = vunpack.c.h.b16 %v641
        %v868 = vunpack.c.h.b16 %v642
        %v869 = vunpack.c.l.b16 %v643
        %v870 = vunpack.c.l.b16 %v644
        %v871 = vunpack.c.h.b16 %v643
        %v872 = vunpack.c.h.b16 %v644
        %v873 = vunpack.c.l.b16 %v645
        %v874 = vunpack.c.l.b16 %v646
        %v875 = vunpack.c.h.b16 %v645
        %v876 = vunpack.c.h.b16 %v646
        %v877 = vunpack.c.l.b16 %v647
        %v878 = vunpack.c.l.b16 %v648
        %v879 = vunpack.c.h.b16 %v647
        %v880 = vunpack.c.h.b16 %v648
        %v881 = vunpack.c.l.b16 %v649
        %v882 = vunpack.c.l.b16 %v650
        %v883 = vunpack.c.h.b16 %v649
        %v884 = vunpack.c.h.b16 %v650
        %v885 = vunpack.c.l.b16 %v651
        %v886 = vunpack.c.l.b16 %v652
        %v887 = vunpack.c.h.b16 %v651
        %v888 = vunpack.c.h.b16 %v652
        %v889 = vunpack.c.l.b16 %v653
        %v890 = vunpack.c.l.b16 %v654
        %v891 = vunpack.c.l.b16 %v655
        %v892 = vunpack.c.l.b16 %v656
        %v893 = vunpack.c.h.b16 %v655
        %v894 = vunpack.c.h.b16 %v656
        %v895 = vunpack.c.l.b16 %v657
        %v896 = vunpack.c.l.b16 %v658
        %v897 = vunpack.c.h.b16 %v657
        %v898 = vunpack.c.h.b16 %v658
        %v899 = vunpack.c.l.b16 %v659
        %v900 = vunpack.c.l.b16 %v660
        %v901 = vunpack.c.h.b16 %v659
        %v902 = vunpack.c.h.b16 %v660
        %v903 = vunpack.c.l.b16 %v661
        %v904 = vunpack.c.l.b16 %v662
        %v905 = vunpack.c.h.b16 %v661
        %v906 = vunpack.c.h.b16 %v662
        %v907 = vunpack.c.l.b16 %v663
        %v908 = vunpack.c.l.b16 %v664
        %v909 = vunpack.c.h.b16 %v663
        %v910 = vunpack.c.h.b16 %v664
        %v911 = vunpack.c.l.b16 %v665
        %v912 = vunpack.c.l.b16 %v666
        %v913 = vunpack.c.h.b16 %v665
        %v914 = vunpack.c.h.b16 %v666
        %v915 = vunpack.c.l.b16 %v667
        %v916 = vunpack.c.l.b16 %v668
        %v917 = vunpack.c.h.b16 %v667
        %v918 = vunpack.c.h.b16 %v668
        %v919 = vunpack.c.l.b16 %v669
        %v920 = vunpack.c.l.b16 %v670
        %v921 = vunpack.c.h.b16 %v669
        %v922 = vunpack.c.h.b16 %v670
        %v923 = vunpack.c.l.b16 %v671
        %v924 = vunpack.c.l.b16 %v672
        %v925 = vunpack.c.h.b16 %v671
        %v926 = vunpack.c.h.b16 %v672
        %v927 = vunpack.c.l.b16 %v673
        %v928 = vunpack.c.l.b16 %v674
        %v929 = vunpack.c.h.b16 %v673
        %v930 = vunpack.c.h.b16 %v674
        %v931 = vunpack.c.l.b16 %v675
        %v932 = vunpack.c.l.b16 %v676
        %v933 = vunpack.c.h.b16 %v675
        %v934 = vunpack.c.h.b16 %v676
        %v935 = vunpack.c.l.b16 %v677
        %v936 = vunpack.c.l.b16 %v678
        %v937 = vunpack.c.l.b16 %v679
        %v938 = vunpack.c.l.b16 %v680
        %v939 = vunpack.c.h.b16 %v679
        %v940 = vunpack.c.h.b16 %v680
        %v941 = vunpack.c.l.b16 %v681
        %v942 = vunpack.c.l.b16 %v682
        %v943 = vunpack.c.h.b16 %v681
        %v944 = vunpack.c.h.b16 %v682
        %v945 = vunpack.c.l.b16 %v683
        %v946 = vunpack.c.l.b16 %v684
        %v947 = vunpack.c.h.b16 %v683
        %v948 = vunpack.c.h.b16 %v684
        %v949 = vunpack.c.l.b16 %v685
        %v950 = vunpack.c.l.b16 %v686
        %v951 = vunpack.c.h.b16 %v685
        %v952 = vunpack.c.h.b16 %v686
        %v953 = vunpack.c.l.b16 %v687
        %v954 = vunpack.c.l.b16 %v688
        %v955 = vunpack.c.h.b16 %v687
        %v956 = vunpack.c.h.b16 %v688
        %v957 = vunpack.c.l.b16 %v689
        %v958 = vunpack.c.l.b16 %v690
        %v959 = vunpack.c.h.b16 %v689
        %v960 = vunpack.c.h.b16 %v690
        %v961 = vunpack.c.l.b16 %v691
        %v962 = vunpack.c.l.b16 %v692
        %v963 = vunpack.c.h.b16 %v691
        %v964 = vunpack.c.h.b16 %v692
        %v965 = vunpack.c.l.b16 %v693
        %v966 = vunpack.c.l.b16 %v694
        %v967 = vunpack.c.h.b16 %v693
        %v968 = vunpack.c.h.b16 %v694
        %v969 = vunpack.c.l.b16 %v695
        %v970 = vunpack.c.l.b16 %v696
        %v971 = vunpack.c.h.b16 %v695
        %v972 = vunpack.c.h.b16 %v696
        %v973 = vunpack.c.l.b16 %v697
        %v974 = vunpack.c.l.b16 %v698
        %v975 = vunpack.c.h.b16 %v697
        %v976 = vunpack.c.h.b16 %v698
        %v977 = vunpack.c.l.b16 %v699
        %v978 = vunpack.c.l.b16 %v700
        %v979 = vunpack.c.h.b16 %v699
        %v980 = vunpack.c.h.b16 %v700
        %v981 = vunpack.c.l.b16 %v701
        %v982 = vunpack.c.l.b16 %v702
        %v983 = vpack.c.b16 %v800, %v799
        %v984 = vpack.c.b16 %v802, %v801
        %v985 = vpack.c.b16 %v804, %v803
        %v986 = vpack.c.b16 %v806, %v805
        %v987 = vpack.c.b16 %v808, %v807
        %v988 = vpack.c.b16 %v810, %v809
        %v989 = vpack.c.b16 %v812, %v811
        %v990 = vpack.c.b16 %v814, %v813
        %v991 = vpack.c.b16 %v816, %v815
        %v992 = vpack.c.b16 %v818, %v817
        %v993 = vpack.c.b16 %v820, %v819
        %v994 = vpack.c.b16 %v822, %v821
        %v995 = vpack.c.b16 %v824, %v823
        %v996 = vpack.c.b16 %v826, %v825
        %v997 = vpack.c.b16 %v828, %v827
        %v998 = vpack.c.b16 %v830, %v829
        %v999 = vpack.c.b16 %v832, %v831
        %v1000 = vpack.c.b16 %v834, %v833
        %v1001 = vpack.c.b16 %v836, %v835
        %v1002 = vpack.c.b16 %v838, %v837
        %v1003 = vpack.c.b16 %v840, %v839
        %v1004 = vpack.c.b16 %v842, %v841
        %v1005 = vpack.c.b16 %v844, %v843
        %v1006 = vpack.c.b16 %v846, %v845
        %v1007 = vpack.c.b16 %v848, %v847
        %v1008 = vpack.c.b16 %v850, %v849
        %v1009 = vpack.c.b16 %v852, %v851
        %v1010 = vpack.c.b16 %v854, %v853
        %v1011 = vpack.c.b16 %v856, %v855
        %v1012 = vpack.c.b16 %v858, %v857
        %v1013 = vpack.c.b16 %v860, %v859
        %v1014 = vpack.c.b16 %v862, %v861
        %v1015 = vpack.c.b16 %v864, %v863
        %v1016 = vpack.c.b16 %v866, %v865
        %v1017 = vpack.c.b16 %v868, %v867
        %v1018 = vpack.c.b16 %v870, %v869
        %v1019 = vpack.c.b16 %v872, %v871
        %v1020 = vpack.c.b16 %v874, %v873
        %v1021 = vpack.c.b16 %v876, %v875
        %v1022 = vpack.c.b16 %v878, %v877
        %v1023 = vpack.c.b16 %v880, %v879
        %v1024 = vpack.c.b16 %v882, %v881
        %v1025 = vpack.c.b16 %v884, %v883
        %v1026 = vpack.c.b16 %v886, %v885
        %v1027 = vpack.c.b16 %v888, %v887
        %v1028 = vpack.c.b16 %v890, %v889
        %v1029 = vpack.c.b16 %v892, %v891
        %v1030 = vpack.c.b16 %v894, %v893
        %v1031 = vpack.c.b16 %v896, %v895
        %v1032 = vpack.c.b16 %v898, %v897
        %v1033 = vpack.c.b16 %v900, %v899
        %v1034 = vpack.c.b16 %v902, %v901
        %v1035 = vpack.c.b16 %v904, %v903
        %v1036 = vpack.c.b16 %v906, %v905
        %v1037 = vpack.c.b16 %v908, %v907
        %v1038 = vpack.c.b16 %v910, %v909
        %v1039 = vpack.c.b16 %v912, %v911
        %v1040 = vpack.c.b16 %v914, %v913
        %v1041 = vpack.c.b16 %v916, %v915
        %v1042 = vpack.c.b16 %v918, %v917
        %v1043 = vpack.c.b16 %v920, %v919
        %v1044 = vpack.c.b16 %v922, %v921
        %v1045 = vpack.c.b16 %v924, %v923
        %v1046 = vpack.c.b16 %v926, %v925
        %v1047 = vpack.c.b16 %v928, %v927
        %v1048 = vpack.c.b16 %v930, %v929
        %v1049 = vpack.c.b16 %v932, %v931
        %v1050 = vpack.c.b16 %v934, %v933
        %v1051 = vpack.c.b16 %v936, %v935
        %v1052 = vpack.c.b16 %v938, %v937
        %v1053 = vpack.c.b16 %v940, %v939
        %v1054 = vpack.c.b16 %v942, %v941
        %v1055 = vpack.c.b16 %v944, %v943
        %v1056 = vpack.c.b16 %v946, %v945
        %v1057 = vpack.c.b16 %v948, %v947
        %v1058 = vpack.c.b16 %v950, %v949
        %v1059 = vpack.c.b16 %v952, %v951
        %v1060 = vpack.c.b16 %v954, %v953
        %v1061 = vpack.c.b16 %v956, %v955
        %v1062 = vpack.c.b16 %v958, %v957
        %v1063 = vpack.c.b16 %v960, %v959
        %v1064 = vpack.c.b16 %v962, %v961
        %v1065 = vpack.c.b16 %v964, %v963
        %v1066 = vpack.c.b16 %v966, %v965
        %v1067 = vpack.c.b16 %v968, %v967
        %v1068 = vpack.c.b16 %v970, %v969
        %v1069 = vpack.c.b16 %v972, %v971
        %v1070 = vpack.c.b16 %v974, %v973
        %v1071 = vpack.c.b16 %v976, %v975
        %v1072 = vpack.c.b16 %v978, %v977
        %v1073 = vpack.c.b16 %v980, %v979
        %v1074 = vpack.c.b16 %v982, %v981
        %vm1167 = vcmask 1043456
        %vm1168 = vcmask 408580
        %vm1169 = vmor %vm1168, %vm1167
        %1170 = vst.msk [vmem:[%s140] sm:$0xff] %vm1169, %v983
        %1171 = vst.msk [vmem:[%s140 + $0x8] sm:$0xff] %vm1169, %v984
        %1172 = vst.msk [vmem:[%s140 + $0x10] sm:$0xff] %vm1169, %v985
        %1173 = vst.msk [vmem:[%s140 + $0x18] sm:$0xff] %vm1169, %v986
        %1174 = vst.msk [vmem:[%s140 + $0x20] sm:$0xff] %vm1169, %v987
        %1175 = vst.msk [vmem:[%s140 + $0x28] sm:$0xff] %vm1169, %v988
        %1176 = vst.msk [vmem:[%s140 + $0x30] sm:$0xff] %vm1169, %v989
        %1177 = vst.msk [vmem:[%s140 + $0x38] sm:$0xff] %vm1169, %v990
        %1178 = vst.msk [vmem:[%s140 + $0x40] sm:$0xff] %vm1169, %v991
        %1179 = vst.msk [vmem:[%s140 + $0x48] sm:$0xff] %vm1169, %v992
        %1180 = vst.msk [vmem:[%s140 + $0x50] sm:$0xff] %vm1169, %v993
        %1181 = vst.msk [vmem:[%s140 + $0x58] sm:$0xff] %vm1169, %v994
        %1182 = vst.msk [vmem:[%s140 + $0x60] sm:$0xff] %vm1169, %v995
        %1183 = vst.msk [vmem:[%s140 + $0x68] sm:$0xff] %vm1169, %v996
        %1184 = vst.msk [vmem:[%s140 + $0x70] sm:$0xff] %vm1169, %v997
        %1185 = vst.msk [vmem:[%s140 + $0x78] sm:$0xff] %vm1169, %v998
        %1186 = vst.msk [vmem:[%s140 + $0x80] sm:$0xff] %vm1169, %v999
        %1187 = vst.msk [vmem:[%s140 + $0x88] sm:$0xff] %vm1169, %v1000
        %1188 = vst.msk [vmem:[%s140 + $0x90] sm:$0xff] %vm1169, %v1001
        %1189 = vst.msk [vmem:[%s140 + $0x98] sm:$0xff] %vm1169, %v1002
        %1190 = vst.msk [vmem:[%s140 + $0xa0] sm:$0xff] %vm1169, %v1003
        %1191 = vst.msk [vmem:[%s140 + $0xa8] sm:$0xff] %vm1169, %v1004
        %vm1192 = vcmask 1040384
        %vm1193 = vcmask 405508
        %vm1194 = vmor %vm1193, %vm1192
        %1195 = vst.msk [vmem:[%s140 + $0xb0] sm:$0x11] %vm1194, %v1005
        %1196 = vst.msk [vmem:[%s140 + $0xb8] sm:$0xff] %vm1169, %v1006
        %1197 = vst.msk [vmem:[%s140 + $0xc0] sm:$0xff] %vm1169, %v1007
        %1198 = vst.msk [vmem:[%s140 + $0xc8] sm:$0xff] %vm1169, %v1008
        %1199 = vst.msk [vmem:[%s140 + $0xd0] sm:$0xff] %vm1169, %v1009
        %1200 = vst.msk [vmem:[%s140 + $0xd8] sm:$0xff] %vm1169, %v1010
        %1201 = vst.msk [vmem:[%s140 + $0xe0] sm:$0xff] %vm1169, %v1011
        %1202 = vst.msk [vmem:[%s140 + $0xe8] sm:$0xff] %vm1169, %v1012
        %1203 = vst.msk [vmem:[%s140 + $0xf0] sm:$0xff] %vm1169, %v1013
        %1204 = vst.msk [vmem:[%s140 + $0xf8] sm:$0xff] %vm1169, %v1014
        %1205 = vst.msk [vmem:[%s140 + $0x100] sm:$0xff] %vm1169, %v1015
        %1206 = vst.msk [vmem:[%s140 + $0x108] sm:$0xff] %vm1169, %v1016
        %1207 = vst.msk [vmem:[%s140 + $0x110] sm:$0xff] %vm1169, %v1017
        %1208 = vst.msk [vmem:[%s140 + $0x118] sm:$0xff] %vm1169, %v1018
        %1209 = vst.msk [vmem:[%s140 + $0x120] sm:$0xff] %vm1169, %v1019
        %1210 = vst.msk [vmem:[%s140 + $0x128] sm:$0xff] %vm1169, %v1020
        %1211 = vst.msk [vmem:[%s140 + $0x130] sm:$0xff] %vm1169, %v1021
        %1212 = vst.msk [vmem:[%s140 + $0x138] sm:$0xff] %vm1169, %v1022
        %1213 = vst.msk [vmem:[%s140 + $0x140] sm:$0xff] %vm1169, %v1023
        %1214 = vst.msk [vmem:[%s140 + $0x148] sm:$0xff] %vm1169, %v1024
        %1215 = vst.msk [vmem:[%s140 + $0x150] sm:$0xff] %vm1169, %v1025
        %1216 = vst.msk [vmem:[%s140 + $0x158] sm:$0xff] %vm1169, %v1026
        %1217 = vst.msk [vmem:[%s140 + $0x160] sm:$0xff] %vm1169, %v1027
        %1218 = vst.msk [vmem:[%s140 + $0x168] sm:$0x11] %vm1194, %v1028
        %1219 = vst.msk [vmem:[%s140 + $0x170] sm:$0xff] %vm1169, %v1029
        %1220 = vst.msk [vmem:[%s140 + $0x178] sm:$0xff] %vm1169, %v1030
        %1221 = vst.msk [vmem:[%s140 + $0x180] sm:$0xff] %vm1169, %v1031
        %1222 = vst.msk [vmem:[%s140 + $0x188] sm:$0xff] %vm1169, %v1032
        %1223 = vst.msk [vmem:[%s140 + $0x190] sm:$0xff] %vm1169, %v1033
        %1224 = vst.msk [vmem:[%s140 + $0x198] sm:$0xff] %vm1169, %v1034
        %1225 = vst.msk [vmem:[%s140 + $0x1a0] sm:$0xff] %vm1169, %v1035
        %1226 = vst.msk [vmem:[%s140 + $0x1a8] sm:$0xff] %vm1169, %v1036
        %1227 = vst.msk [vmem:[%s140 + $0x1b0] sm:$0xff] %vm1169, %v1037
        %1228 = vst.msk [vmem:[%s140 + $0x1b8] sm:$0xff] %vm1169, %v1038
        %1229 = vst.msk [vmem:[%s140 + $0x1c0] sm:$0xff] %vm1169, %v1039
        %1230 = vst.msk [vmem:[%s140 + $0x1c8] sm:$0xff] %vm1169, %v1040
        %1231 = vst.msk [vmem:[%s140 + $0x1d0] sm:$0xff] %vm1169, %v1041
        %1232 = vst.msk [vmem:[%s140 + $0x1d8] sm:$0xff] %vm1169, %v1042
        %1233 = vst.msk [vmem:[%s140 + $0x1e0] sm:$0xff] %vm1169, %v1043
        %1234 = vst.msk [vmem:[%s140 + $0x1e8] sm:$0xff] %vm1169, %v1044
        %1235 = vst.msk [vmem:[%s140 + $0x1f0] sm:$0xff] %vm1169, %v1045
        %1236 = vst.msk [vmem:[%s140 + $0x1f8] sm:$0xff] %vm1169, %v1046
        %1237 = vst.msk [vmem:[%s140 + $0x200] sm:$0xff] %vm1169, %v1047
        %1238 = vst.msk [vmem:[%s140 + $0x208] sm:$0xff] %vm1169, %v1048
        %1239 = vst.msk [vmem:[%s140 + $0x210] sm:$0xff] %vm1169, %v1049
        %1240 = vst.msk [vmem:[%s140 + $0x218] sm:$0xff] %vm1169, %v1050
        %1241 = vst.msk [vmem:[%s140 + $0x220] sm:$0x11] %vm1194, %v1051
        %1242 = vst.msk [vmem:[%s140 + $0x228] sm:$0xff] %vm1169, %v1052
        %1243 = vst.msk [vmem:[%s140 + $0x230] sm:$0xff] %vm1169, %v1053
        %1244 = vst.msk [vmem:[%s140 + $0x238] sm:$0xff] %vm1169, %v1054
        %1245 = vst.msk [vmem:[%s140 + $0x240] sm:$0xff] %vm1169, %v1055
        %1246 = vst.msk [vmem:[%s140 + $0x248] sm:$0xff] %vm1169, %v1056
        %1247 = vst.msk [vmem:[%s140 + $0x250] sm:$0xff] %vm1169, %v1057
        %1248 = vst.msk [vmem:[%s140 + $0x258] sm:$0xff] %vm1169, %v1058
        %1249 = vst.msk [vmem:[%s140 + $0x260] sm:$0xff] %vm1169, %v1059
        %1250 = vst.msk [vmem:[%s140 + $0x268] sm:$0xff] %vm1169, %v1060
        %1251 = vst.msk [vmem:[%s140 + $0x270] sm:$0xff] %vm1169, %v1061
        %1252 = vst.msk [vmem:[%s140 + $0x278] sm:$0xff] %vm1169, %v1062
        %1253 = vst.msk [vmem:[%s140 + $0x280] sm:$0xff] %vm1169, %v1063
        %1254 = vst.msk [vmem:[%s140 + $0x288] sm:$0xff] %vm1169, %v1064
        %1255 = vst.msk [vmem:[%s140 + $0x290] sm:$0xff] %vm1169, %v1065
        %1256 = vst.msk [vmem:[%s140 + $0x298] sm:$0xff] %vm1169, %v1066
        %1257 = vst.msk [vmem:[%s140 + $0x2a0] sm:$0xff] %vm1169, %v1067
        %1258 = vst.msk [vmem:[%s140 + $0x2a8] sm:$0xff] %vm1169, %v1068
        %1259 = vst.msk [vmem:[%s140 + $0x2b0] sm:$0xff] %vm1169, %v1069
        %1260 = vst.msk [vmem:[%s140 + $0x2b8] sm:$0xff] %vm1169, %v1070
        %1261 = vst.msk [vmem:[%s140 + $0x2c0] sm:$0xff] %vm1169, %v1071
        %1262 = vst.msk [vmem:[%s140 + $0x2c8] sm:$0xff] %vm1169, %v1072
        %1263 = vst.msk [vmem:[%s140 + $0x2d0] sm:$0xff] %vm1169, %v1073
        %1264 = vst.msk [vmem:[%s140 + $0x2d8] sm:$0x11] %vm1194, %v1074
        %s1265 = smul.u32 4, %s15
        %p1266 = scmp.lt.s32.totalorder %s1265, 7
        %s1267 = scalar_select %p1266, %s1265, 7
        %s1268 = smul.addr %s1267, 46
        %s1269 = smul.addr %s1268, 4
        %s1270 = scalar_lea.vmem %s1, %s1269
        // Predicated region
        $region29: #{tpu_custom_call.1} parent=23 // pred_check
          %p1271 = pneg %p59
        $region30: #{tpu_custom_call.1} parent=23 // pred_check_branch
          %1273 = sbr.rel (%p1271) target = $region32
        $region31: #{tpu_custom_call.1} parent=23 // pred_region
          %s1274 = smul.u32 4, %s15
        $region32: #{tpu_custom_call.1} parent=23 // pred_fallthru
          _
      $region24: #{tpu_custom_call.1} parent=5 // pred_fallthru
        _
      %p1275 = scmp.le.s32.totalorder 2, %s10
      // Predicated region
      $region33: #{tpu_custom_call.1} parent=5 // pred_check
        %p1276 = pneg %p1275
      $region34: #{tpu_custom_call.1} parent=5 // pred_check_branch
        %1278 = sbr.rel (%p1276) target = $region36
      $region35: #{tpu_custom_call.1} parent=5 // pred_region
        %s1279 = ssub.s32 %s10, 2
        // Predicated region
        $region37: #{tpu_custom_call.1} parent=35 // pred_check
          %p1280 = pneg %p65
        $region38: #{tpu_custom_call.1} parent=35 // pred_check_branch
          %1282 = sbr.rel (%p1280) target = $region40
        $region39: #{tpu_custom_call.1} parent=35 // pred_region
          %s1283 = smul.u32 4, %s16
          %p1284 = scmp.lt.s32.totalorder %s1283, 7
          %s1285 = scalar_select %p1284, %s1283, 7
          %s1286 = smul.addr %s1285, 46
          %s1287 = smul.addr %s1286, 4
          %s1288 = scalar_lea.vmem %s1, %s1287
        $region40: #{tpu_custom_call.1} parent=35 // pred_fallthru
          _
      $region36: #{tpu_custom_call.1} parent=5 // pred_fallthru
        _
    $region6: #{tpu_custom_call.1} parent=1 // loop_footer
      %s14 = sadd.s32 1, %s10
    $region7: #{tpu_custom_call.1} parent=1 // loop_footer_branch
      %9 = sbr.rel target = $region3
    $region8: #{tpu_custom_call.1} parent=1 // loop_exit
      _
    %1289 = vsyncpa [#allocation3], 1
    %s1290 = scalar_lea.sflag [#allocation3], 1
    %1291 = vsyncpa %s1290, 1

</llo_original>
